<compile_context>
chip_gen: v5e
topology: v5e:2x2
jax: 0.10.0
libtpu: 0.0.40
codegen_flags: <defaults>
</compile_context>

<pallas_src>
import math

import jax
import jax.numpy as jnp
from jax.experimental import pallas as pl
from jax.experimental.pallas import tpu as pltpu


# --------------------------------------------------------------------------- #
# Kernels
# --------------------------------------------------------------------------- #
def _add_pos_3d_kernel(tok_ref, pos_ref, out_ref):
    # tok: (TS, B, E), pos: (TS, E) -> sublane-broadcast over batch in-kernel.
    out_ref[...] = tok_ref[...] + pos_ref[...][:, None, :]
    # TODO(synk): for dropout p > 0, draw a keep-mask here with
    # pltpu.prng_seed / pltpu.prng_random_bits and scale by 1/(1-p).


def _make_add_pos_2d_kernel(batch: int):
    def kernel(tok_ref, pos_ref, out_ref):
        # tok/out: (TS, B*E) lane-dense slabs; pos: (TS, E).  Replicate pos
        # across batch in VMEM (hidden under HBM slack) instead of writing a
        # broadcast (S, B, E) pos tensor to HBM and reading it back.
        out_ref[...] = tok_ref[...] + jnp.tile(pos_ref[...], (1, batch))
        # TODO(synk): dropout p > 0 mask would be fused here as well.
    return kernel


# --------------------------------------------------------------------------- #
# Positional table (matches the PyTorch buffer)
# --------------------------------------------------------------------------- #
def make_pos_embedding(emb_size: int, maxlen: int = 5000,
                       dtype=jnp.float32) -> jnp.ndarray:
    """Deterministic sin/cos positional table, shape (maxlen, 1, emb_size)."""
    den = jnp.exp(-jnp.arange(0, emb_size, 2, dtype=jnp.float32)
                  * (math.log(10000.0) / emb_size))              # ceil(E/2)
    pos = jnp.arange(0, maxlen, dtype=jnp.float32)[:, None]       # (maxlen, 1)
    angles = pos * den[None, :]                                    # (maxlen, ceil(E/2))
    pe = jnp.zeros((maxlen, emb_size), dtype=jnp.float32)
    pe = pe.at[:, 0::2].set(jnp.sin(angles))
    pe = pe.at[:, 1::2].set(jnp.cos(angles[:, : emb_size // 2]))   # odd-E safe
    return pe[:, None, :].astype(dtype)                            # (maxlen, 1, E)


# --------------------------------------------------------------------------- #
# Tiling helper
# --------------------------------------------------------------------------- #
def _choose_block_rows(S, row_bytes, *, align=1, requested=None,
                       target_bytes=4 << 20, min_steps=4):
    """Rows per tile: ~4 MiB token slabs, capped so the grid keeps >= min_steps
    steps (pipeline overlap + megacore sharding), aligned for sublane density."""
    if S <= align:
        return S
    if requested is not None:
        ts = requested
    else:
        ts = max(1, target_bytes // max(1, row_bytes))
        ts = min(ts, (S + min_steps - 1) // min_steps)   # keep >= min_steps steps
    if align > 1:
        ts = max(align, (ts // align) * align)
    return min(ts, S)


# --------------------------------------------------------------------------- #
# Wrapper
# --------------------------------------------------------------------------- #
def positional_encoding(token_embedding: jnp.ndarray,
                        pos_embedding: jnp.ndarray,
                        *, block_rows: int | None = None,
                        dropout_p: float = 0.0,
                        use_pallas: bool = True) -> jnp.ndarray:
    """token_embedding: (S, B, E); pos_embedding: (maxlen, 1, E)."""
    S, B, E = token_embedding.shape
    maxlen = pos_embedding.shape[0]
    assert S <= maxlen, f"seq_len {S} exceeds positional table maxlen {maxlen}"
    assert dropout_p == 0.0  # TODO(synk): fused PRNG dropout for p > 0.

    dtype = token_embedding.dtype
    itemsize = jnp.dtype(dtype).itemsize

    # 2-D (S, E) slice of the table, cast once to the token dtype (bf16 models
    # move half the HBM bytes).  For best perf, cache this pre-cast slice
    # outside the forward pass -- it is a fixed buffer.
    pos2d = pos_embedding[:S, 0, :].astype(dtype)                  # (S, E)

    if not use_pallas:
        # p == 0: the fastest kernel is no kernel -- let XLA fuse the add.
        return token_embedding + pos2d[:, None, :]

    cost = pl.CostEstimate(
        flops=S * B * E,
        transcendentals=0,
        bytes_accessed=2 * S * B * E * itemsize + S * E * itemsize)
    params = pltpu.CompilerParams(dimension_semantics=("parallel",),
                                  vmem_limit_bytes=48 << 20)

    row_bytes = B * E * itemsize
    # 3-D broadcast path only when both lanes (E) and sublanes (B) stay dense;
    # small-B / small-E shapes go through the flattened lane-dense path.
    use_3d = (E % 128 == 0) and (B >= 8)
    # Guard: a flattened 8-row minimum tile on a very wide row could blow the
    # VMEM budget (4x double-buffered slabs); fall back to the 3-D path then.
    if not use_3d and S > 8 and 4 * 8 * row_bytes > (40 << 20):
        use_3d = True

    if use_3d:
        ts = _choose_block_rows(S, row_bytes, align=1, requested=block_rows)
        grid = (pl.cdiv(S, ts),)
        return pl.pallas_call(
            _add_pos_3d_kernel,
            out_shape=jax.ShapeDtypeStruct((S, B, E), dtype),
            grid=grid,
            in_specs=[
                pl.BlockSpec((ts, B, E), lambda i: (i, 0, 0)),
                pl.BlockSpec((ts, E), lambda i: (i, 0)),
            ],
            out_specs=pl.BlockSpec((ts, B, E), lambda i: (i, 0, 0)),
            compiler_params=params,
            cost_estimate=cost,
        )(token_embedding, pos2d)

    # Flattened lane-dense path: (B, E) -> one lane axis (free contiguous
    # reshape on the token); pos stays (S, E) and is replicated in-kernel.
    tok2d = token_embedding.reshape(S, B * E)
    ts = _choose_block_rows(S, row_bytes, align=8, requested=block_rows)
    grid = (pl.cdiv(S, ts),)
    out2d = pl.pallas_call(
        _make_add_pos_2d_kernel(B),
        out_shape=jax.ShapeDtypeStruct((S, B * E), dtype),
        grid=grid,
        in_specs=[
            pl.BlockSpec((ts, B * E), lambda i: (i, 0)),
            pl.BlockSpec((ts, E), lambda i: (i, 0)),
        ],
        out_specs=pl.BlockSpec((ts, B * E), lambda i: (i, 0)),
        compiler_params=params,
        cost_estimate=cost,
    )(tok2d, pos2d)
    return out2d.reshape(S, B, E)


# --------------------------------------------------------------------------- #
# Demo / correctness check
# --------------------------------------------------------------------------- #
if __name__ == "__main__":
    key = jax.random.PRNGKey(0)
    k1, k2, k3 = jax.random.split(key, 3)

    # --- run 1: small-E flattened path, f32, multi-step pipelined grid -------
    S1, B1, E1 = 64, 2, 32
    tok1 = jax.random.normal(k1, (S1, B1, E1), dtype=jnp.float32)
    pe1 = make_pos_embedding(E1, maxlen=128)
    out1 = jax.block_until_ready(positional_encoding(tok1, pe1, block_rows=16))
    ref1 = tok1 + pe1[:S1].astype(tok1.dtype)
    assert out1.shape == (S1, B1, E1)
    assert jnp.allclose(out1, ref1, atol=1e-6), "mismatch (f32 / flattened path)"

    # --- run 2: lane+sublane-dense 3-D broadcast path, bf16, multi-step grid -
    S2, B2, E2 = 32, 8, 128
    tok2 = jax.random.normal(k2, (S2, B2, E2), dtype=jnp.float32).astype(jnp.bfloat16)
    pe2 = make_pos_embedding(E2, maxlen=64)
    out2 = jax.block_until_ready(positional_encoding(tok2, pe2, block_rows=8))
    ref2 = tok2 + pe2[:S2].astype(tok2.dtype)
    assert out2.shape == (S2, B2, E2)
    assert jnp.allclose(out2.astype(jnp.float32), ref2.astype(jnp.float32),
                        atol=1e-2), "mismatch (bf16 / 3D path)"

    # --- run 3: E % 128 == 0 but B < 8 -> routed to flattened path -----------
    S3, B3, E3 = 16, 4, 128
    tok3 = jax.random.normal(k3, (S3, B3, E3), dtype=jnp.float32)
    pe3 = make_pos_embedding(E3, maxlen=32)
    out3 = jax.block_until_ready(positional_encoding(tok3, pe3))
    ref3 = tok3 + pe3[:S3].astype(tok3.dtype)
    assert out3.shape == (S3, B3, E3)
    assert jnp.allclose(out3, ref3, atol=1e-6), "mismatch (f32 / small-B path)"

    print("KERNEL_OK")
</pallas_src>

<mosaic_0001>
module attributes {stable_mosaic.version = 11 : i64} {
  func.func @kernel(%arg0: i32, %arg1: memref<16x64xf32, #tpu.memory_space<vmem>>, %arg2: memref<16x32xf32, #tpu.memory_space<vmem>>, %arg3: memref<16x64xf32, #tpu.memory_space<vmem>>) attributes {dimension_semantics = [#tpu.dimension_semantics<parallel>], iteration_bounds = array<i64: 4>, scalar_prefetch = 0 : i64, scratch_operands = 0 : i64, tpu.core_type = #tpu.core_type<tc>, window_params = [{transform_indices = @transform_0, window_bounds = array<i64: 16, 64>}, {transform_indices = @transform_1, window_bounds = array<i64: 16, 32>}, {transform_indices = @transform_2, window_bounds = array<i64: 16, 64>}]} {
    %c0 = arith.constant 0 : index
    %c0_0 = arith.constant 0 : index
    %0 = vector.load %arg1[%c0, %c0_0] : memref<16x64xf32, #tpu.memory_space<vmem>>, vector<16x64xf32>
    %c0_1 = arith.constant 0 : index
    %c0_2 = arith.constant 0 : index
    %1 = vector.load %arg2[%c0_1, %c0_2] : memref<16x32xf32, #tpu.memory_space<vmem>>, vector<16x32xf32>
    %2 = tpu.concatenate %1, %1 in 1 : vector<16x32xf32>, vector<16x32xf32> -> vector<16x64xf32>
    %3 = arith.addf %0, %2 : vector<16x64xf32>
    %c0_3 = arith.constant 0 : index
    %c0_4 = arith.constant 0 : index
    %4 = vector.load %arg3[%c0_3, %c0_4] : memref<16x64xf32, #tpu.memory_space<vmem>>, vector<16x64xf32>
    tpu.vector_store %arg3[%c0_3, %c0_4], %3 {strides = array<i32>} : memref<16x64xf32, #tpu.memory_space<vmem>>, vector<16x64xf32>,
    return
  }
  func.func @transform_0(%arg0: i32) -> (i32, i32) {
    %c0_i32 = arith.constant 0 : i32
    %c0_i32_0 = arith.constant 0 : i32
    return %arg0, %c0_i32 : i32, i32
  }
  func.func @transform_1(%arg0: i32) -> (i32, i32) {
    %c0_i32 = arith.constant 0 : i32
    %c0_i32_0 = arith.constant 0 : i32
    return %arg0, %c0_i32 : i32, i32
  }
  func.func @transform_2(%arg0: i32) -> (i32, i32) {
    %c0_i32 = arith.constant 0 : i32
    %c0_i32_0 = arith.constant 0 : i32
    return %arg0, %c0_i32 : i32, i32
  }
}

</mosaic_0001>

<llo_original>
// kernel: tpu_custom_call.1
$region0: #{tpu_custom_call.1}
  #allocation0 [shape = 'u32[]', space=smem, size = 0x4, offset = 0x4, fixed_abs, tag = 'smem constant byte address 0x4 - core index']
  #allocation1 [shape = 'u32[72,128]{1,0:T(1,128)}', space=vmem, size = 0x9000, scoped, tag = 'internal scratch']
  %s0 = inlined_call_operand.vmem [shape: f32[64,64], index: 0, kind: input, shape index: {}]
  %s1 = inlined_call_operand.vmem [shape: f32[64,32], index: 1, kind: input, shape index: {}]
  %s2 = inlined_call_operand.hbm [shape: f32[64,64], index: 2, kind: output, shape index: {}]
  %s3 = sld [smem:[#allocation0]]
  $region41: #{tpu_custom_call.1} parent=0
    _
  %s5 = ssub.s32 1, %s3
  %s6 = scalar_select 0, %s5, %s3
  $region1: #{tpu_custom_call.1} parent=0
    #allocation2 [shape = 'u8[16384]{0}', space=vmem, size = 0x4000, scoped, tag = 'output window, operand 0']
    #allocation3 [shape = 's32[2]{0}', space=sflag, size = 0x8, scoped, tag = 'scoped memory for tpu_custom_call.1']
    %7 = vsyncpa [#allocation3], 0
    %s8 = scalar_lea.sflag [#allocation3], 1
    %9 = vsyncpa %s8, 0
    loop: start=0, step=1, limit=6
    $region2: #{tpu_custom_call.1} parent=1 // loop_pre_header
      _
    $region3: #{tpu_custom_call.1} parent=1 // loop_header
      %s11 = sphi 0, %s15
      %p12 = scmp.ge.s32.totalorder %s11, 6
      %s21 = sphi 0, %s23
      %s24 = sphi 0, %s21
      %s25 = sphi 0, %s24
      %s41 = sphi 0, %s25
      %s47 = sphi 0, %s49
      %s50 = sphi 0, %s47
      %s51 = sphi 0, %s50
      %s67 = sphi 0, %s51
      %s73 = sphi 0, %s75
      %s76 = sphi 0, %s73
      %s77 = sphi 0, %s76
      %s93 = sphi 0, %s77
    $region4: #{tpu_custom_call.1} parent=1 // loop_header_branch
      %14 = sbr.rel (%p12) target = $region8
    $region5: #{tpu_custom_call.1} parent=1 // loop_body
      %s16 = ssub.s32 %s11, 1
      %s17 = ssub.s32 %s11, 2
      %s18 = sadd.s32 %s11, 1
      %s19 = ssub.s32 %s11, %s18
      %p20 = scmp.eq.s32.totalorder %s19, 0
      %s22 = sadd.s32 %s21, 1
      %s23 = scalar_select %p20, %s21, %s22
      %p26 = pneg %p20
      %p27 = scmp.eq.s32.totalorder %s11, 3
      %p28 = por %p26, %p27
      %p29 = scmp.ne.s32.totalorder %s21, %s24
      %p30 = scmp.eq.s32.totalorder %s11, 0
      %p31 = por %p29, %p30
      %p32 = scmp.ne.s32.totalorder %s21, %s24
      %p33 = scmp.eq.s32.totalorder %s16, 3
      %p34 = por %p32, %p33
      %p35 = scmp.ne.s32.totalorder %s24, %s25
      %p36 = scmp.eq.s32.totalorder %s16, 0
      %p37 = por %p35, %p36
      %p38 = scmp.ne.s32.totalorder %s24, %s25
      %p39 = scmp.eq.s32.totalorder %s17, 3
      %p40 = por %p38, %p39
      %p42 = scmp.ne.s32.totalorder %s25, %s41
      %p43 = scmp.eq.s32.totalorder %s17, 0
      %p44 = por %p42, %p43
      %s45 = ssub.s32 %s11, %s18
      %p46 = scmp.eq.s32.totalorder %s45, 0
      %s48 = sadd.s32 %s47, 1
      %s49 = scalar_select %p46, %s47, %s48
      %p52 = pneg %p46
      %p53 = scmp.eq.s32.totalorder %s11, 3
      %p54 = por %p52, %p53
      %p55 = scmp.ne.s32.totalorder %s47, %s50
      %p56 = scmp.eq.s32.totalorder %s11, 0
      %p57 = por %p55, %p56
      %p58 = scmp.ne.s32.totalorder %s47, %s50
      %p59 = scmp.eq.s32.totalorder %s16, 3
      %p60 = por %p58, %p59
      %p61 = scmp.ne.s32.totalorder %s50, %s51
      %p62 = scmp.eq.s32.totalorder %s16, 0
      %p63 = por %p61, %p62
      %p64 = scmp.ne.s32.totalorder %s50, %s51
      %p65 = scmp.eq.s32.totalorder %s17, 3
      %p66 = por %p64, %p65
      %p68 = scmp.ne.s32.totalorder %s51, %s67
      %p69 = scmp.eq.s32.totalorder %s17, 0
      %p70 = por %p68, %p69
      %s71 = ssub.s32 %s11, %s18
      %p72 = scmp.eq.s32.totalorder %s71, 0
      %s74 = sadd.s32 %s73, 1
      %s75 = scalar_select %p72, %s73, %s74
      %p78 = pneg %p72
      %p79 = scmp.eq.s32.totalorder %s11, 3
      %p80 = por %p78, %p79
      %p81 = scmp.ne.s32.totalorder %s73, %s76
      %p82 = scmp.eq.s32.totalorder %s11, 0
      %p83 = por %p81, %p82
      %p84 = scmp.ne.s32.totalorder %s73, %s76
      %p85 = scmp.eq.s32.totalorder %s16, 3
      %p86 = por %p84, %p85
      %p87 = scmp.ne.s32.totalorder %s76, %s77
      %p88 = scmp.eq.s32.totalorder %s16, 0
      %p89 = por %p87, %p88
      %p90 = scmp.ne.s32.totalorder %s76, %s77
      %p91 = scmp.eq.s32.totalorder %s17, 3
      %p92 = por %p90, %p91
      %p94 = scmp.ne.s32.totalorder %s77, %s93
      %p95 = scmp.eq.s32.totalorder %s17, 0
      %p96 = por %p94, %p95
      %p97 = scmp.le.s32.totalorder 1, %s11
      %p98 = scmp.lt.s32.totalorder %s11, 5
      %p99 = pnand %p97, %p98
      %p100 = pneg %p99
      // Predicated region
      $region9: #{tpu_custom_call.1} parent=5 // pred_check
        _
      $region10: #{tpu_custom_call.1} parent=5 // pred_check_branch
        %102 = sbr.rel (%p99) target = $region12
      $region11: #{tpu_custom_call.1} parent=5 // pred_region
        %s103 = ssub.s32 %s11, 1
      $region12: #{tpu_custom_call.1} parent=5 // pred_fallthru
        _
      %p104 = scmp.lt.s32.totalorder %s11, 4
      // Predicated region
      $region13: #{tpu_custom_call.1} parent=5 // pred_check
        %p105 = pneg %p104
      $region14: #{tpu_custom_call.1} parent=5 // pred_check_branch
        %107 = sbr.rel (%p105) target = $region16
      $region15: #{tpu_custom_call.1} parent=5 // pred_region
        // Predicated region
        $region17: #{tpu_custom_call.1} parent=15 // pred_check
          %p108 = pneg %p31
        $region18: #{tpu_custom_call.1} parent=15 // pred_check_branch
          %110 = sbr.rel (%p108) target = $region20
        $region19: #{tpu_custom_call.1} parent=15 // pred_region
          %s111 = smul.u32 2, %s11
          %p112 = scmp.lt.s32.totalorder %s111, 7
          %s113 = scalar_select %p112, %s111, 7
          %s114 = smul.addr %s113, 8
          %s115 = scalar_lea.vmem %s0, %s114
          %s116 = smul.u32 2, %s11
        $region20: #{tpu_custom_call.1} parent=15 // pred_fallthru
          _
        // Predicated region
        $region21: #{tpu_custom_call.1} parent=15 // pred_check
          %p117 = pneg %p57
        $region22: #{tpu_custom_call.1} parent=15 // pred_check_branch
          %119 = sbr.rel (%p117) target = $region24
        $region23: #{tpu_custom_call.1} parent=15 // pred_region
          %s120 = smul.u32 2, %s11
          %p121 = scmp.lt.s32.totalorder %s120, 7
          %s122 = scalar_select %p121, %s120, 7
          %s123 = smul.addr %s122, 8
          %s124 = scalar_lea.vmem %s1, %s123
          %s125 = smul.u32 2, %s11
        $region24: #{tpu_custom_call.1} parent=15 // pred_fallthru
          _
      $region16: #{tpu_custom_call.1} parent=5 // pred_fallthru
        _
      %p126 = scmp.le.s32.totalorder 1, %s11
      %p127 = scmp.lt.s32.totalorder %s11, 5
      %p128 = pnand %p126, %p127
      %p129 = pneg %p128
      // Predicated region
      $region25: #{tpu_custom_call.1} parent=5 // pred_check
        _
      $region26: #{tpu_custom_call.1} parent=5 // pred_check_branch
        %131 = sbr.rel (%p128) target = $region28
      $region27: #{tpu_custom_call.1} parent=5 // pred_region
        %s132 = ssub.s32 %s11, 1
        %s133 = smul.u32 2, %s16
        %p134 = scmp.lt.s32.totalorder %s133, 7
        %s135 = scalar_select %p134, %s133, 7
        %s136 = smul.addr %s135, 8
        %s137 = scalar_lea.vmem %s0, %s136
        %p138 = pneg %p37
        %p139 = pneg %p34
        %s140 = smul.u32 2, %s16
        %p141 = scmp.lt.s32.totalorder %s140, 7
        %s142 = scalar_select %p141, %s140, 7
        %s143 = smul.addr %s142, 8
        %s144 = scalar_lea.vmem %s1, %s143
        %p145 = pneg %p63
        %p146 = pneg %p60
        %p147 = pneg %p89
        %p148 = pneg %p86
        %s149 = sand.u32 %s76, 1
        %s150 = scalar_lea.sflag [#allocation3], %s149
        %s151 = sand.u32 %s76, 1
        %s152 = smul.addr %s151, 16
        %s153 = scalar_lea.vmem [#allocation2], %s152
        %s154 = smul.u32 2, %s16
        %p155 = scmp.lt.s32.totalorder %s154, 7
        %s156 = scalar_select %p155, %s154, 7
        %s157 = smul.addr %s156, 8
        %s158 = scalar_lea.vmem %s0, %s157
        %s159 = smul.u32 2, %s16
        %s160 = smul.u32 2, %s16
        %p161 = scmp.lt.s32.totalorder %s160, 7
        %s162 = scalar_select %p161, %s160, 7
        %s163 = smul.addr %s162, 8
        %s164 = scalar_lea.vmem %s1, %s163
        %s165 = smul.u32 2, %s16
        %s166 = smul.u32 2, %s16
        %v167 = vld [vmem:[%s158] sm:$0xff]
        %v168 = vld [vmem:[%s158 + $0x8] sm:$0xff]
        %v169 = vld [vmem:[%s164] sm:$0xff]
        %v170 = vld [vmem:[%s164 + $0x8] sm:$0xff]
        %173 = vrot.lane.b32.xlu0 %v169, 32
        %v174 = vpop.permute.xlu0 %173
        %175 = vrot.lane.b32.xlu0 %v170, 32
        %v176 = vpop.permute.xlu0 %175
        %vm179 = vcmask 261120
        %v180 = vsel %vm179, %v169, %v174
        %v181 = vsel %vm179, %v170, %v176
        %v182 = vadd.f32 %v167, %v180
        %v183 = vadd.f32 %v168, %v181
        %vm184 = vcmask 523264
        %185 = vst.msk [vmem:[%s153] sm:$0xff] %vm184, %v182
        %186 = vst.msk [vmem:[%s153 + $0x8] sm:$0xff] %vm184, %v183
        %s187 = sand.u32 %s76, 1
        %s188 = scalar_lea.sflag [#allocation3], %s187
        %s189 = sand.u32 %s76, 1
        %s190 = smul.addr %s189, 16
        %s191 = scalar_lea.vmem [#allocation2], %s190
        // Predicated region
        $region29: #{tpu_custom_call.1} parent=27 // pred_check
          %p192 = pneg %p86
        $region30: #{tpu_custom_call.1} parent=27 // pred_check_branch
          %194 = sbr.rel (%p192) target = $region32
        $region31: #{tpu_custom_call.1} parent=27 // pred_region
          %s195 = smul.u32 2, %s16
          %197 = vsyncadd %s188, 0
          %s198 = smul.addr %s195, 8
          %s199 = scalar_lea.hbm %s2, %s198
          %s200 = sshll.u32 %s191, 4
          %s201 = int_to_ptr.vmem [resolvable:$true] %s200
          %s202 = sshll.u32 %s199, 4
          %s203 = int_to_ptr.hbm [resolvable:$true] %s202
          %208 = dma.vmem_to_hbm [thread:$0]  %s201, 256, %s203, %s188, 128, 128, 8
        $region32: #{tpu_custom_call.1} parent=27 // pred_fallthru
          _
      $region28: #{tpu_custom_call.1} parent=5 // pred_fallthru
        _
      %p209 = scmp.le.s32.totalorder 2, %s11
      // Predicated region
      $region33: #{tpu_custom_call.1} parent=5 // pred_check
        %p210 = pneg %p209
      $region34: #{tpu_custom_call.1} parent=5 // pred_check_branch
        %212 = sbr.rel (%p210) target = $region36
      $region35: #{tpu_custom_call.1} parent=5 // pred_region
        %s213 = ssub.s32 %s11, 2
        // Predicated region
        $region37: #{tpu_custom_call.1} parent=35 // pred_check
          %p214 = pneg %p92
        $region38: #{tpu_custom_call.1} parent=35 // pred_check_branch
          %216 = sbr.rel (%p214) target = $region40
        $region39: #{tpu_custom_call.1} parent=35 // pred_region
          %s217 = sand.u32 %s77, 1
          %s218 = scalar_lea.sflag [#allocation3], %s217
          %s219 = sand.u32 %s77, 1
          %s220 = smul.addr %s219, 16
          %s221 = scalar_lea.vmem [#allocation2], %s220
          %223 = dma.done %s218, 256
        $region40: #{tpu_custom_call.1} parent=35 // pred_fallthru
          _
      $region36: #{tpu_custom_call.1} parent=5 // pred_fallthru
        _
    $region6: #{tpu_custom_call.1} parent=1 // loop_footer
      %s15 = sadd.s32 1, %s11
    $region7: #{tpu_custom_call.1} parent=1 // loop_footer_branch
      %10 = sbr.rel target = $region3
    $region8: #{tpu_custom_call.1} parent=1 // loop_exit
      _
    %224 = vsyncpa [#allocation3], 1
    %s225 = scalar_lea.sflag [#allocation3], 1
    %226 = vsyncpa %s225, 1

</llo_original>
